<compile_context>
chip_gen: v5e
topology: v5e:2x2
jax: 0.10.0
libtpu: 0.0.40
codegen_flags: <defaults>
</compile_context>

<pallas_src>
import functools

import jax
import jax.numpy as jnp
from jax.experimental import pallas as pl
from jax.experimental.pallas import tpu as pltpu


def _pad_width_kernel(x_ref, o_ref, *, w):
    # x_ref: (TILE_R, W)      input rows (flattened C*H)
    # o_ref: (TILE_R, W_fix)  output rows, width padded with -1
    tile_r, w_fix = o_ref.shape
    dtype = o_ref.dtype
    w_lo = (w // 128) * 128  # lane-aligned prefix of the copy region

    if w_lo == w:
        # W is a multiple of 128: both stores are lane-aligned / unmasked.
        o_ref[:, :w] = x_ref[...]
        if w < w_fix:
            o_ref[:, w:] = jnp.full((tile_r, w_fix - w), -1, dtype=dtype)
    else:
        # 1) Unmasked aligned copy of the 128-aligned prefix.
        if w_lo > 0:
            o_ref[:, :w_lo] = x_ref[:, :w_lo]
        # 2) The single straddling lane group [w_lo, g_hi): copy tail padded
        #    with -1, written exactly once (no double-written column group).
        g_hi = min(w_lo + 128, w_fix)
        tail = jnp.concatenate(
            [x_ref[:, w_lo:w], jnp.full((tile_r, g_hi - w), -1, dtype=dtype)],
            axis=1,
        )
        o_ref[:, w_lo:g_hi] = tail
        # 3) Remaining columns: aligned unmasked constant fill.
        if g_hi < w_fix:
            o_ref[:, g_hi:] = jnp.full((tile_r, w_fix - g_hi), -1, dtype=dtype)


def my_same_size_transform(image, fix_size, target=None):
    """JAX/Pallas equivalent of MySameSizeTransform.forward.

    image: (C, H, W) array.
    fix_size: (fix_h, fix_w); only fix_size[1] (target width) is used,
              matching the PyTorch module.
    Returns (padded_image, target).
    """
    c, h, w = image.shape
    w_fix = int(fix_size[1])
    w_new = w_fix - w
    if w_new < 0:
        raise ValueError("fix_size[1] must be >= image width")
    if w_new == 0:
        return image, target

    # Flatten (C, H) into one row axis: pure row-wise copy+fill problem.
    rows = c * h
    x2 = image.reshape(rows, w)

    itemsize = jnp.dtype(image.dtype).itemsize
    # Sublane granularity for this dtype (>=8; 16 for bf16, 32 for int8).
    sub = max(8, 32 // itemsize)

    # --- Generation-aware VMEM budget -------------------------------------
    try:
        vmem_capacity = int(pltpu.get_tpu_info().vmem_capacity_bytes)
    except Exception:  # pragma: no cover - conservative (v7x-sized) default
        vmem_capacity = 64 * 1024 * 1024

    if vmem_capacity <= 64 * 1024 * 1024:
        # v7x: 64 MiB VMEM per TensorCore -> keep 2x(in+out) <= ~48 MiB.
        pair_budget = 20 * 1024 * 1024
        vmem_limit = 48 * 1024 * 1024
    else:
        # v5e / v6e: 128 MiB physical VMEM; lift well past the scoped default.
        pair_budget = 24 * 1024 * 1024
        vmem_limit = 80 * 1024 * 1024

    bytes_per_row = (w + w_fix) * itemsize
    min_pair = min(rows, sub) * bytes_per_row

    # Width guard: if even the minimal row block would blow the VMEM limit,
    # fall back to XLA's pad (hits the HBM roofline with zero Pallas overhead).
    if 2 * min_pair + (2 << 20) > vmem_limit:
        pad_val = jnp.asarray(-1, image.dtype)
        padded = jax.lax.pad(
            image, pad_val, ((0, 0, 0), (0, 0, 0), (0, w_new, 0))
        )
        return padded, target

    # Biggest row tile that keeps the double-buffered working set in budget.
    max_rows = pair_budget // bytes_per_row
    tile_r = min(rows, max(sub, (max_rows // sub) * sub))

    # If a single mega-tile would cover all rows, split so the grid has >= 2
    # steps and both of v7x's TensorCores participate (axis is "parallel").
    if tile_r >= rows and rows >= 2 * sub:
        half = (((rows + 1) // 2 + sub - 1) // sub) * sub
        tile_r = min(tile_r, half)

    grid_r = pl.cdiv(rows, tile_r)

    kernel = functools.partial(_pad_width_kernel, w=w)

    out2 = pl.pallas_call(
        kernel,
        out_shape=jax.ShapeDtypeStruct((rows, w_fix), image.dtype),
        grid=(grid_r,),
        in_specs=[pl.BlockSpec((tile_r, w), lambda r: (r, 0))],
        out_specs=pl.BlockSpec((tile_r, w_fix), lambda r: (r, 0)),
        compiler_params=pltpu.CompilerParams(
            dimension_semantics=("parallel",),
            vmem_limit_bytes=vmem_limit,
        ),
        cost_estimate=pl.CostEstimate(
            flops=0,
            transcendentals=0,
            bytes_accessed=rows * (w + w_fix) * itemsize,
        ),
    )(x2)

    return out2.reshape(c, h, w_fix), target


if __name__ == "__main__":
    # Deterministic "module init": fix_size is the only constructor argument
    # (no learned parameters in this module).
    fix_size = (16, 32)

    key = jax.random.PRNGKey(0)
    # Small CHW image consistent with the forward: channels=4, H=16, W=16.
    image = jax.random.normal(key, (4, 16, 16), dtype=jnp.float32)

    res, tgt = my_same_size_transform(image, fix_size, target=None)
    res = jax.block_until_ready(res)

    # Reference check (plain JAX), mirrors torch.cat((image, -1*ones), dim=2).
    ref = jnp.concatenate(
        [image, jnp.full((4, 16, fix_size[1] - 16), -1.0, jnp.float32)], axis=2
    )
    assert res.shape == (4, 16, fix_size[1])
    assert res.dtype == jnp.float32
    assert tgt is None
    assert bool(jnp.allclose(res, ref)), "mismatch vs reference"

    # Larger, lane-aligned shape: exercises multi-step row tiling.
    big = jax.random.normal(jax.random.PRNGKey(1), (3, 1000, 384), jnp.float32)
    big_res, _ = my_same_size_transform(big, (1000, 512))
    big_res = jax.block_until_ready(big_res)
    big_ref = jnp.concatenate(
        [big, jnp.full((3, 1000, 512 - 384), -1.0, jnp.float32)], axis=2
    )
    assert bool(jnp.allclose(big_res, big_ref)), "mismatch vs reference (big)"

    # Unaligned width: exercises the straddling-lane-group copy/fill path.
    odd = jax.random.normal(jax.random.PRNGKey(2), (2, 100, 200), jnp.float32)
    odd_res, _ = my_same_size_transform(odd, (100, 333))
    odd_res = jax.block_until_ready(odd_res)
    odd_ref = jnp.concatenate(
        [odd, jnp.full((2, 100, 333 - 200), -1.0, jnp.float32)], axis=2
    )
    assert bool(jnp.allclose(odd_res, odd_ref)), "mismatch vs reference (odd)"

    print("KERNEL_OK")
</pallas_src>

<mosaic_0001>
module attributes {stable_mosaic.version = 11 : i64} {
  func.func @_pad_width_kernel(%arg0: i32, %arg1: memref<32x16xf32, #tpu.memory_space<vmem>>, %arg2: memref<32x32xf32, #tpu.memory_space<vmem>>) attributes {dimension_semantics = [#tpu.dimension_semantics<parallel>], iteration_bounds = array<i64: 2>, scalar_prefetch = 0 : i64, scratch_operands = 0 : i64, tpu.core_type = #tpu.core_type<tc>, window_params = [{transform_indices = @transform_0, window_bounds = array<i64: 32, 16>}, {transform_indices = @transform_1, window_bounds = array<i64: 32, 32>}]} {
    %c0 = arith.constant 0 : index
    %c0_0 = arith.constant 0 : index
    %0 = vector.load %arg1[%c0, %c0_0] : memref<32x16xf32, #tpu.memory_space<vmem>>, vector<32x16xf32>
    %cst = arith.constant -1.000000e+00 : f32
    %1 = vector.broadcast %cst : f32 to vector<32x16xf32>
    %2 = tpu.concatenate %0, %1 in 1 : vector<32x16xf32>, vector<32x16xf32> -> vector<32x32xf32>
    %c0_1 = arith.constant 0 : index
    %c0_2 = arith.constant 0 : index
    %3 = vector.load %arg2[%c0_1, %c0_2] : memref<32x32xf32, #tpu.memory_space<vmem>>, vector<32x32xf32>
    tpu.vector_store %arg2[%c0_1, %c0_2], %2 {strides = array<i32>} : memref<32x32xf32, #tpu.memory_space<vmem>>, vector<32x32xf32>,
    return
  }
  func.func @transform_0(%arg0: i32) -> (i32, i32) {
    %c0_i32 = arith.constant 0 : i32
    %c0_i32_0 = arith.constant 0 : i32
    return %arg0, %c0_i32 : i32, i32
  }
  func.func @transform_1(%arg0: i32) -> (i32, i32) {
    %c0_i32 = arith.constant 0 : i32
    %c0_i32_0 = arith.constant 0 : i32
    return %arg0, %c0_i32 : i32, i32
  }
}

</mosaic_0001>

<llo_original>
// kernel: tpu_custom_call.1
$region0: #{tpu_custom_call.1}
  #allocation0 [shape = 'u32[]', space=smem, size = 0x4, offset = 0x4, fixed_abs, tag = 'smem constant byte address 0x4 - core index']
  #allocation1 [shape = 'u32[72,128]{1,0:T(1,128)}', space=vmem, size = 0x9000, scoped, tag = 'internal scratch']
  %s0 = inlined_call_operand.vmem [shape: f32[64,16], index: 0, kind: input, shape index: {}]
  %s1 = inlined_call_operand.vmem [shape: f32[64,32], index: 1, kind: output, shape index: {}]
  %s2 = sld [smem:[#allocation0]]
  $region37: #{tpu_custom_call.1} parent=0
    _
  %s4 = ssub.s32 1, %s2
  %s5 = scalar_select 0, %s4, %s2
  loop: start=0, step=1, limit=4
  $region2: #{tpu_custom_call.1} parent=0 // loop_pre_header
    _
  $region3: #{tpu_custom_call.1} parent=0 // loop_header
    %s7 = sphi 0, %s11
    %p8 = scmp.ge.s32.totalorder %s7, 4
    %s17 = sphi 0, %s19
    %s20 = sphi 0, %s17
    %s21 = sphi 0, %s20
    %s37 = sphi 0, %s21
    %s43 = sphi 0, %s45
    %s46 = sphi 0, %s43
    %s47 = sphi 0, %s46
    %s63 = sphi 0, %s47
  $region4: #{tpu_custom_call.1} parent=0 // loop_header_branch
    %10 = sbr.rel (%p8) target = $region8
  $region5: #{tpu_custom_call.1} parent=0 // loop_body
    %s12 = ssub.s32 %s7, 1
    %s13 = ssub.s32 %s7, 2
    %s14 = sadd.s32 %s7, 1
    %s15 = ssub.s32 %s7, %s14
    %p16 = scmp.eq.s32.totalorder %s15, 0
    %s18 = sadd.s32 %s17, 1
    %s19 = scalar_select %p16, %s17, %s18
    %p22 = pneg %p16
    %p23 = scmp.eq.s32.totalorder %s7, 1
    %p24 = por %p22, %p23
    %p25 = scmp.ne.s32.totalorder %s17, %s20
    %p26 = scmp.eq.s32.totalorder %s7, 0
    %p27 = por %p25, %p26
    %p28 = scmp.ne.s32.totalorder %s17, %s20
    %p29 = scmp.eq.s32.totalorder %s12, 1
    %p30 = por %p28, %p29
    %p31 = scmp.ne.s32.totalorder %s20, %s21
    %p32 = scmp.eq.s32.totalorder %s12, 0
    %p33 = por %p31, %p32
    %p34 = scmp.ne.s32.totalorder %s20, %s21
    %p35 = scmp.eq.s32.totalorder %s13, 1
    %p36 = por %p34, %p35
    %p38 = scmp.ne.s32.totalorder %s21, %s37
    %p39 = scmp.eq.s32.totalorder %s13, 0
    %p40 = por %p38, %p39
    %s41 = ssub.s32 %s7, %s14
    %p42 = scmp.eq.s32.totalorder %s41, 0
    %s44 = sadd.s32 %s43, 1
    %s45 = scalar_select %p42, %s43, %s44
    %p48 = pneg %p42
    %p49 = scmp.eq.s32.totalorder %s7, 1
    %p50 = por %p48, %p49
    %p51 = scmp.ne.s32.totalorder %s43, %s46
    %p52 = scmp.eq.s32.totalorder %s7, 0
    %p53 = por %p51, %p52
    %p54 = scmp.ne.s32.totalorder %s43, %s46
    %p55 = scmp.eq.s32.totalorder %s12, 1
    %p56 = por %p54, %p55
    %p57 = scmp.ne.s32.totalorder %s46, %s47
    %p58 = scmp.eq.s32.totalorder %s12, 0
    %p59 = por %p57, %p58
    %p60 = scmp.ne.s32.totalorder %s46, %s47
    %p61 = scmp.eq.s32.totalorder %s13, 1
    %p62 = por %p60, %p61
    %p64 = scmp.ne.s32.totalorder %s47, %s63
    %p65 = scmp.eq.s32.totalorder %s13, 0
    %p66 = por %p64, %p65
    %p67 = scmp.le.s32.totalorder 1, %s7
    %p68 = scmp.lt.s32.totalorder %s7, 3
    %p69 = pnand %p67, %p68
    %p70 = pneg %p69
    // Predicated region
    $region9: #{tpu_custom_call.1} parent=5 // pred_check
      _
    $region10: #{tpu_custom_call.1} parent=5 // pred_check_branch
      %72 = sbr.rel (%p69) target = $region12
    $region11: #{tpu_custom_call.1} parent=5 // pred_region
      %s73 = ssub.s32 %s7, 1
    $region12: #{tpu_custom_call.1} parent=5 // pred_fallthru
      _
    %p74 = scmp.lt.s32.totalorder %s7, 2
    // Predicated region
    $region13: #{tpu_custom_call.1} parent=5 // pred_check
      %p75 = pneg %p74
    $region14: #{tpu_custom_call.1} parent=5 // pred_check_branch
      %77 = sbr.rel (%p75) target = $region16
    $region15: #{tpu_custom_call.1} parent=5 // pred_region
      // Predicated region
      $region17: #{tpu_custom_call.1} parent=15 // pred_check
        %p78 = pneg %p27
      $region18: #{tpu_custom_call.1} parent=15 // pred_check_branch
        %80 = sbr.rel (%p78) target = $region20
      $region19: #{tpu_custom_call.1} parent=15 // pred_region
        %s81 = smul.u32 4, %s7
        %p82 = scmp.lt.s32.totalorder %s81, 7
        %s83 = scalar_select %p82, %s81, 7
        %s84 = smul.addr %s83, 8
        %s85 = scalar_lea.vmem %s0, %s84
        %s86 = smul.u32 4, %s7
      $region20: #{tpu_custom_call.1} parent=15 // pred_fallthru
        _
    $region16: #{tpu_custom_call.1} parent=5 // pred_fallthru
      _
    %p87 = scmp.le.s32.totalorder 1, %s7
    %p88 = scmp.lt.s32.totalorder %s7, 3
    %p89 = pnand %p87, %p88
    %p90 = pneg %p89
    // Predicated region
    $region21: #{tpu_custom_call.1} parent=5 // pred_check
      _
    $region22: #{tpu_custom_call.1} parent=5 // pred_check_branch
      %92 = sbr.rel (%p89) target = $region24
    $region23: #{tpu_custom_call.1} parent=5 // pred_region
      %s93 = ssub.s32 %s7, 1
      %s94 = smul.u32 4, %s12
      %p95 = scmp.lt.s32.totalorder %s94, 7
      %s96 = scalar_select %p95, %s94, 7
      %s97 = smul.addr %s96, 8
      %s98 = scalar_lea.vmem %s0, %s97
      %p99 = pneg %p33
      %p100 = pneg %p30
      %p101 = pneg %p59
      %p102 = pneg %p56
      %s103 = smul.u32 4, %s12
      %p104 = scmp.lt.s32.totalorder %s103, 7
      %s105 = scalar_select %p104, %s103, 7
      %s106 = smul.addr %s105, 8
      %s107 = scalar_lea.vmem %s1, %s106
      %s108 = smul.u32 4, %s12
      %p109 = scmp.lt.s32.totalorder %s108, 7
      %s110 = scalar_select %p109, %s108, 7
      %s111 = smul.addr %s110, 8
      %s112 = scalar_lea.vmem %s0, %s111
      %s113 = smul.u32 4, %s12
      %s114 = smul.u32 4, %s12
      %p115 = scmp.lt.s32.totalorder %s114, 7
      %s116 = scalar_select %p115, %s114, 7
      %s117 = smul.addr %s116, 8
      %s118 = scalar_lea.vmem %s1, %s117
      %s119 = smul.u32 4, %s12
      %v120 = vld [vmem:[%s112] sm:$0xff]
      %v121 = vld [vmem:[%s112 + $0x8] sm:$0xff]
      %v122 = vld [vmem:[%s112 + $0x10] sm:$0xff]
      %v123 = vld [vmem:[%s112 + $0x18] sm:$0xff]
      %vm124 = vcmask 130048
      %v125 = vsel %vm124, %v120, -1.0
      %v126 = vsel %vm124, %v121, -1.0
      %v127 = vsel %vm124, %v122, -1.0
      %v128 = vsel %vm124, %v123, -1.0
      %vm129 = vcmask 261120
      %130 = vst.msk [vmem:[%s118] sm:$0xff] %vm129, %v125
      %131 = vst.msk [vmem:[%s118 + $0x8] sm:$0xff] %vm129, %v126
      %132 = vst.msk [vmem:[%s118 + $0x10] sm:$0xff] %vm129, %v127
      %133 = vst.msk [vmem:[%s118 + $0x18] sm:$0xff] %vm129, %v128
      %s134 = smul.u32 4, %s12
      %p135 = scmp.lt.s32.totalorder %s134, 7
      %s136 = scalar_select %p135, %s134, 7
      %s137 = smul.addr %s136, 8
      %s138 = scalar_lea.vmem %s1, %s137
      // Predicated region
      $region25: #{tpu_custom_call.1} parent=23 // pred_check
        %p139 = pneg %p56
      $region26: #{tpu_custom_call.1} parent=23 // pred_check_branch
        %141 = sbr.rel (%p139) target = $region28
      $region27: #{tpu_custom_call.1} parent=23 // pred_region
        %s142 = smul.u32 4, %s12
      $region28: #{tpu_custom_call.1} parent=23 // pred_fallthru
        _
    $region24: #{tpu_custom_call.1} parent=5 // pred_fallthru
      _
    %p143 = scmp.le.s32.totalorder 2, %s7
    // Predicated region
    $region29: #{tpu_custom_call.1} parent=5 // pred_check
      %p144 = pneg %p143
    $region30: #{tpu_custom_call.1} parent=5 // pred_check_branch
      %146 = sbr.rel (%p144) target = $region32
    $region31: #{tpu_custom_call.1} parent=5 // pred_region
      %s147 = ssub.s32 %s7, 2
      // Predicated region
      $region33: #{tpu_custom_call.1} parent=31 // pred_check
        %p148 = pneg %p62
      $region34: #{tpu_custom_call.1} parent=31 // pred_check_branch
        %150 = sbr.rel (%p148) target = $region36
      $region35: #{tpu_custom_call.1} parent=31 // pred_region
        %s151 = smul.u32 4, %s13
        %p152 = scmp.lt.s32.totalorder %s151, 7
        %s153 = scalar_select %p152, %s151, 7
        %s154 = smul.addr %s153, 8
        %s155 = scalar_lea.vmem %s1, %s154
      $region36: #{tpu_custom_call.1} parent=31 // pred_fallthru
        _
    $region32: #{tpu_custom_call.1} parent=5 // pred_fallthru
      _
  $region6: #{tpu_custom_call.1} parent=0 // loop_footer
    %s11 = sadd.s32 1, %s7
  $region7: #{tpu_custom_call.1} parent=0 // loop_footer_branch
    %6 = sbr.rel target = $region3
  $region8: #{tpu_custom_call.1} parent=0 // loop_exit
    _

</llo_original>
